<compile_context>
chip_gen: v7x
topology: tpu7x:2x2x1
jax: 0.10.0
libtpu: 0.0.40
codegen_flags: <defaults>
</compile_context>

<pallas_src>
import jax
import jax.numpy as jnp
from jax.experimental import pallas as pl
from jax.experimental.pallas import tpu as pltpu


# Per-buffer VMEM budget for a tile.  With double-buffered input + output the
# pipeline holds ~4x this, which stays under every generation's scoped-VMEM
# default (v5e 16 MiB, v6e 32 MiB, v7x 32 MiB).
_TILE_BUDGET_BYTES = 4 << 20
_VMEM_LIMIT_BYTES = 32 << 20


def _copy_kernel(x_ref, o_ref):
    # Straight tile copy in the flat 2-D layout (no reshape in-kernel).
    # TODO(synk): fuse the downstream consumer (activation / norm / matmul
    # input cast) here so this HBM round-trip buys real compute; as a bare
    # copy it can never beat the metadata-only reshape.
    o_ref[...] = x_ref[...]


def _sublane_multiple(itemsize: int) -> int:
    # Sub-32-bit dtypes pack along sublanes: 8 rows for 32-bit, 16 for 16-bit,
    # 32 for 8-bit keep vregs fully packed and stores unmasked.
    return max(8, 32 // max(1, itemsize))


def _pick_tiles(n: int, hw: int, itemsize: int):
    """VMEM-budgeted (tm, tl) tile sizes for the flat (N, H*W) copy."""
    sub = _sublane_multiple(itemsize)

    # ---- lane (last) dim: prefer the full row -> one contiguous fat DMA ----
    if hw <= 128 or sub * hw * itemsize <= _TILE_BUDGET_BYTES:
        tl = hw
    else:
        # Very wide rows: split the lane axis to a 128-multiple within budget,
        # preferring one that divides hw (no masked edge tile).
        max_tl = max(128, ((_TILE_BUDGET_BYTES // (sub * itemsize)) // 128) * 128)
        tl = max_tl
        for cand in range(max_tl, 127, -128):
            if hw % cand == 0:
                tl = cand
                break

    # ---- sublane dim: largest dtype-aware multiple fitting the budget ----
    rows_budget = max(1, _TILE_BUDGET_BYTES // max(1, tl * itemsize))
    tm = min(n, (rows_budget // sub) * sub)
    if tm <= 0:
        tm = min(n, sub)
    if n <= sub:
        # Tiny batch: take the full extent (allowed when block == array dim).
        tm = n

    # ---- v7x core-split: if everything landed in one block but there is
    # enough data to matter, split the row axis so both TensorCores work ----
    if pl.cdiv(n, tm) < 2 and pl.cdiv(hw, tl) < 2 and n >= 2 * sub:
        half_rows = ((pl.cdiv(n, 2) + sub - 1) // sub) * sub
        tm = max(sub, min(tm, half_rows))

    return tm, tl


def unflatten(x: jax.Array, size, *, use_pallas: bool = False) -> jax.Array:
    """Pallas equivalent of Unflatten(size).forward(x).

    :param x: 2-D array of shape (n_batches, h * w)
    :param size: tuple (h, w)  (channels, length)
    :param use_pallas: default False -> metadata-only reshape (zero HBM
        traffic, the fastest possible path).  True -> materialize the copy
        through a Pallas kernel (only worthwhile if real compute is fused in).
    """
    h, w = size
    n, hw = x.shape
    assert h * w == hw, "h * w must equal the flattened feature dim"

    if not use_pallas:
        # Metadata-only reshape: zero HBM traffic.  This is the default.
        return x.reshape(n, h, w)

    itemsize = jnp.dtype(x.dtype).itemsize
    tm, tl = _pick_tiles(n, hw, itemsize)
    grid = (pl.cdiv(n, tm), pl.cdiv(hw, tl))

    flat = pl.pallas_call(
        _copy_kernel,
        out_shape=jax.ShapeDtypeStruct((n, hw), x.dtype),
        grid=grid,
        in_specs=[pl.BlockSpec((tm, tl), lambda i, j: (i, j))],
        out_specs=pl.BlockSpec((tm, tl), lambda i, j: (i, j)),
        compiler_params=pltpu.CompilerParams(
            dimension_semantics=("parallel", "parallel"),
            vmem_limit_bytes=_VMEM_LIMIT_BYTES,
        ),
    )(x)

    # Free metadata reshape to the (N, H, W) view expected by the module.
    return flat.reshape(n, h, w)


if __name__ == "__main__":
    key = jax.random.PRNGKey(0)

    # Small shapes consistent with the module: size = (channels, length) = (4, 16)
    n_batches, h, w = 2, 4, 16
    x = jax.random.normal(key, (n_batches, h * w), dtype=jnp.float32)

    expected = x.reshape(n_batches, h, w)

    # Default (recommended) path: metadata-only reshape.
    out_default = jax.block_until_ready(unflatten(x, (h, w)))
    assert out_default.shape == (n_batches, h, w)
    assert out_default.dtype == x.dtype
    assert bool(jnp.all(out_default == expected))

    # Pallas path (exercised once for correctness of the kernel itself).
    out_pallas = jax.block_until_ready(unflatten(x, (h, w), use_pallas=True))
    assert out_pallas.shape == (n_batches, h, w)
    assert bool(jnp.all(out_pallas == expected))

    # A second, lane-aligned case (hw multiple of 128, n multiple of 8) to
    # exercise the full-row tile / multi-block row path.
    n2, h2, w2 = 16, 2, 128
    x2 = jax.random.normal(jax.random.PRNGKey(0), (n2, h2 * w2), dtype=jnp.float32)
    out2 = jax.block_until_ready(unflatten(x2, (h2, w2), use_pallas=True))
    assert bool(jnp.all(out2 == x2.reshape(n2, h2, w2)))

    print("KERNEL_OK")
</pallas_src>

<mosaic_0001>
module attributes {stable_mosaic.version = 11 : i64} {
  func.func @_copy_kernel(%arg0: i32, %arg1: i32, %arg2: memref<2x64xf32, #tpu.memory_space<vmem>>, %arg3: memref<2x64xf32, #tpu.memory_space<vmem>>) attributes {dimension_semantics = [#tpu.dimension_semantics<parallel>, #tpu.dimension_semantics<parallel>], iteration_bounds = array<i64: 1, 1>, scalar_prefetch = 0 : i64, scratch_operands = 0 : i64, tpu.core_type = #tpu.core_type<tc>, window_params = [{transform_indices = @transform_0, window_bounds = array<i64: 2, 64>}, {transform_indices = @transform_1, window_bounds = array<i64: 2, 64>}]} {
    %c0 = arith.constant 0 : index
    %c0_0 = arith.constant 0 : index
    %0 = vector.load %arg2[%c0, %c0_0] : memref<2x64xf32, #tpu.memory_space<vmem>>, vector<2x64xf32>
    %c0_1 = arith.constant 0 : index
    %c0_2 = arith.constant 0 : index
    %1 = vector.load %arg3[%c0_1, %c0_2] : memref<2x64xf32, #tpu.memory_space<vmem>>, vector<2x64xf32>
    tpu.vector_store %arg3[%c0_1, %c0_2], %0 {strides = array<i32>} : memref<2x64xf32, #tpu.memory_space<vmem>>, vector<2x64xf32>,
    return
  }
  func.func @transform_0(%arg0: i32, %arg1: i32) -> (i32, i32) {
    %c0_i32 = arith.constant 0 : i32
    return %arg0, %arg1 : i32, i32
  }
  func.func @transform_1(%arg0: i32, %arg1: i32) -> (i32, i32) {
    %c0_i32 = arith.constant 0 : i32
    return %arg0, %arg1 : i32, i32
  }
}

</mosaic_0001>

<llo_original>
// kernel: tpu_custom_call.1
$region0: #{tpu_custom_call.1}
  #allocation0 [shape = 'u32[]', space=smem, size = 0x4, offset = 0x4, fixed_abs, tag = 'smem constant byte address 0x4 - core index']
  #allocation1 [shape = 'u32[144,128]{1,0:T(1,128)}', space=vmem, size = 0x12000, scoped, tag = 'internal scratch']
  %s0 = inlined_call_operand.hbm [shape: f32[2,64], index: 0, kind: input, shape index: {}]
  %s1 = inlined_call_operand.hbm [shape: f32[2,64], index: 1, kind: output, shape index: {}]
  %s2 = sld [smem:[#allocation0]]
  $region18: #{tpu_custom_call.1} parent=0
    _
  %s4 = ssub.s32 1, %s2
  %s5 = scalar_select 0, %s4, %s2
  $region1: #{tpu_custom_call.1} parent=0
    #allocation2 [shape = 'u8[1024]{0}', space=vmem, size = 0x400, scoped, tag = 'input window, operand 0, single buffered']
    #allocation3 [shape = 's32[1]{0}', space=sflag, size = 0x4, scoped, tag = 'scoped memory for tpu_custom_call.1']
    #allocation4 [shape = 's32[1]{0}', space=sflag, size = 0x4, scoped, tag = 'scoped memory for tpu_custom_call.1']
    #allocation5 [shape = 'u8[1024]{0}', space=vmem, size = 0x400, scoped, tag = 'output window, operand 0, single buffered']
    %6 = vsyncpa [#allocation3], 0
    %7 = vsyncpa [#allocation4], 0
    // Predicated region
    $region2: #{tpu_custom_call.1} parent=1 // pred_check
      _
    $region3: #{tpu_custom_call.1} parent=1 // pred_check_branch
      %9 = sbr.rel (0) target = $region5
    $region4: #{tpu_custom_call.1} parent=1 // pred_region
      %s11 = ssub.s32 32, 32
      %12 = vsyncadd [#allocation3], %s11
      %s14 = sshll.u32 [#allocation2], 4
      %s15 = int_to_ptr.vmem [resolvable:$true] %s14
      %17 = dma.hbm_to_vmem [thread:$0]  %s0, 32, %s15, [#allocation3]
    $region5: #{tpu_custom_call.1} parent=1 // pred_fallthru
      _
    // Predicated region
    $region6: #{tpu_custom_call.1} parent=1 // pred_check
      _
    $region7: #{tpu_custom_call.1} parent=1 // pred_check_branch
      %19 = sbr.rel (0) target = $region9
    $region8: #{tpu_custom_call.1} parent=1 // pred_region
      %20 = dma.done [#allocation3], 32
    $region9: #{tpu_custom_call.1} parent=1 // pred_fallthru
      _
    %v21 = vld [vmem:[#allocation2] sm:$0x3]
    %vm22 = vcmask 517120
    %23 = vst.msk [vmem:[#allocation5] sm:$0x3] %vm22, %v21
    // Predicated region
    $region10: #{tpu_custom_call.1} parent=1 // pred_check
      _
    $region11: #{tpu_custom_call.1} parent=1 // pred_check_branch
      %25 = sbr.rel (0) target = $region13
    $region12: #{tpu_custom_call.1} parent=1 // pred_region
      %s27 = ssub.s32 32, 32
      %28 = vsyncadd [#allocation4], %s27
      %s30 = sshll.u32 [#allocation5], 4
      %s31 = int_to_ptr.vmem [resolvable:$true] %s30
      %33 = dma.vmem_to_hbm [thread:$0]  %s31, 32, %s1, [#allocation4]
    $region13: #{tpu_custom_call.1} parent=1 // pred_fallthru
      _
    // Predicated region
    $region14: #{tpu_custom_call.1} parent=1 // pred_check
      _
    $region15: #{tpu_custom_call.1} parent=1 // pred_check_branch
      %35 = sbr.rel (0) target = $region17
    $region16: #{tpu_custom_call.1} parent=1 // pred_region
      %36 = dma.done [#allocation4], 32
    $region17: #{tpu_custom_call.1} parent=1 // pred_fallthru
      _
    %37 = vsyncpa [#allocation3], 1
    %38 = vsyncpa [#allocation4], 1

</llo_original>
